<compile_context>
chip_gen: v6e
topology: v6e:2x2x1
jax: 0.10.0
libtpu: 0.0.40
codegen_flags: <defaults>
</compile_context>

<pallas_src>
import functools

import jax
import jax.numpy as jnp
from jax.experimental import pallas as pl
from jax.experimental.pallas import tpu as pltpu

LN_EPS = 1e-5  # torch.nn.LayerNorm default


# --------------------------------------------------------------------------------------
# Kernel
# --------------------------------------------------------------------------------------
def _mlp_kernel(layer_dims, num_layers, num_steps, matmul_dtype, approx_swish,
                zt_ref, w_ref, v_ref, out_ref):
    """Fused MLP (optionally rolled out num_steps times) on transposed activations.

      zt_ref : (latent_dim, TB)              z^T tile, batch on the 128-lane axis
      w_ref  : (L+1, dout_max, din_max)      packed nn.Linear weights (PyTorch layout)
      v_ref  : (L+1, dout_max, 3)            packed [bias, gamma, beta] columns (f32)
      out_ref: (latent_dim, TB)
    """
    z = zt_ref[...].astype(matmul_dtype)
    for step in range(num_steps):
        for i, (n_in, n_out) in enumerate(layer_dims):
            w = w_ref[i][:n_out, :n_in]                  # (n_out, n_in), matmul dtype
            vec = v_ref[i]                               # (dout_max, 3), f32
            b = vec[:n_out, 0:1]                         # (n_out, 1)
            # Linear on the MXU, f32 accumulation: (n_out, n_in) @ (n_in, TB).
            h = jnp.dot(w, z, preferred_element_type=jnp.float32) + b
            if i < num_layers:
                gamma = vec[:n_out, 1:2]
                beta = vec[:n_out, 2:3]
                # LayerNorm over the feature axis (= axis 0 in this transposed layout).
                mean = jnp.mean(h, axis=0, keepdims=True)              # (1, TB)
                cent = h - mean
                var = jnp.mean(cent * cent, axis=0, keepdims=True)     # biased, like torch
                h = cent * jax.lax.rsqrt(var + LN_EPS)
                h = h * gamma + beta
                # swish: x * sigmoid(x); reciprocal on the EUP slot.
                sig = pl.reciprocal(1.0 + jnp.exp(-h), approx=approx_swish)
                z = (h * sig).astype(matmul_dtype)
            else:
                # final layer: nn.Identity() norm + get_act('linear') -> nothing to do.
                z = h                                    # f32
        if step + 1 < num_steps:
            z = z.astype(matmul_dtype)                   # feed state back for next step
    out_ref[...] = z.astype(out_ref.dtype)


# --------------------------------------------------------------------------------------
# Parameter packing (do once, reuse across rollout calls)
# --------------------------------------------------------------------------------------
def pack_params(layer_params, matmul_dtype=jnp.bfloat16):
    """Pack per-layer dicts {'w' (n_out,n_in), 'b', ['gamma','beta']} into two arrays."""
    num_layers = len(layer_params) - 1
    layer_dims = tuple((int(p["w"].shape[1]), int(p["w"].shape[0])) for p in layer_params)
    din_max = max(n_in for n_in, _ in layer_dims)
    dout_max = max(n_out for _, n_out in layer_dims)
    nl = len(layer_params)

    w_stack = jnp.zeros((nl, dout_max, din_max), matmul_dtype)
    v_stack = jnp.zeros((nl, dout_max, 3), jnp.float32)
    for i, p in enumerate(layer_params):
        n_out, n_in = p["w"].shape
        w_stack = w_stack.at[i, :n_out, :n_in].set(p["w"].astype(matmul_dtype))
        v_stack = v_stack.at[i, :n_out, 0].set(p["b"].astype(jnp.float32))
        if i < num_layers:
            v_stack = v_stack.at[i, :n_out, 1].set(p["gamma"].astype(jnp.float32))
            v_stack = v_stack.at[i, :n_out, 2].set(p["beta"].astype(jnp.float32))
    return w_stack, v_stack, layer_dims


# --------------------------------------------------------------------------------------
# Tiling helpers
# --------------------------------------------------------------------------------------
def _num_tensorcores():
    try:
        dev = jax.devices()[0]
    except Exception:
        return 1
    n = getattr(dev, "num_cores", None)
    if isinstance(n, int) and n >= 1:
        return n
    kind = str(getattr(dev, "device_kind", "")).lower()
    if "v7" in kind:       # v7x exposes 2 TensorCores per chip
        return 2
    return 1               # v5e / v6e: single TensorCore -> single grid step


def _choose_batch_tile(bp, num_cores, max_tb):
    """Multiple-of-128 tile dividing bp: as few grid steps as possible, but at least
    `num_cores` steps when that is achievable (so all TensorCores get work)."""
    cap = max(128, min(bp, max_tb))
    cands = [t for t in range(128, cap + 1, 128) if bp % t == 0]
    if not cands:
        return 128
    multi = [t for t in cands if bp // t >= num_cores]
    return max(multi) if multi else max(cands)


# --------------------------------------------------------------------------------------
# Forward passes
# --------------------------------------------------------------------------------------
def recurrent_dynamics_forward_t(z_t, packed_params, *, num_steps=1, out_dtype=None,
                                 approx_swish=None, max_tb=8192, num_cores=None,
                                 vmem_limit_bytes=32 * 1024 * 1024):
    """Primary (lane-dense) API: z_t is (latent_dim, Bp) with Bp a multiple of 128.
    Returns (latent_dim, Bp). No wrapper-side pad/transpose/slice."""
    w_stack, v_stack, layer_dims = packed_params
    D, bp = z_t.shape
    assert bp % 128 == 0, "batch (lane) axis must be padded to a multiple of 128"
    assert D == layer_dims[0][0], "z_t feature dim must equal the first layer's n_in"
    assert num_steps >= 1
    num_layers = len(layer_dims) - 1
    d_out_last = layer_dims[-1][1]
    if num_steps > 1:
        assert d_out_last == layer_dims[0][0], "rollout needs latent_dim -> latent_dim"

    matmul_dtype = w_stack.dtype
    if out_dtype is None:
        out_dtype = z_t.dtype
    if approx_swish is None:
        approx_swish = matmul_dtype != jnp.float32
    if num_cores is None:
        num_cores = _num_tensorcores()
    tb = _choose_batch_tile(bp, num_cores, max_tb)

    nl, dout_max, din_max = w_stack.shape
    kernel = functools.partial(_mlp_kernel, layer_dims, num_layers, num_steps,
                               matmul_dtype, approx_swish)

    return pl.pallas_call(
        kernel,
        out_shape=jax.ShapeDtypeStruct((d_out_last, bp), out_dtype),
        grid_spec=pltpu.PrefetchScalarGridSpec(
            num_scalar_prefetch=0,
            grid=(bp // tb,),
            in_specs=[
                pl.BlockSpec((D, tb), lambda i: (0, i)),                    # z^T batch tile
                pl.BlockSpec((nl, dout_max, din_max), lambda i: (0, 0, 0)),  # weight stack
                pl.BlockSpec((nl, dout_max, 3), lambda i: (0, 0, 0)),        # b/gamma/beta
            ],
            out_specs=pl.BlockSpec((d_out_last, tb), lambda i: (0, i)),
        ),
        compiler_params=pltpu.CompilerParams(
            dimension_semantics=("parallel",),
            vmem_limit_bytes=vmem_limit_bytes,
        ),
    )(z_t, w_stack, v_stack)


def recurrent_dynamics_forward(z, layer_params, *, num_steps=1,
                               matmul_dtype=jnp.bfloat16, out_dtype=None,
                               max_tb=8192, num_cores=None):
    """PyTorch-layout convenience wrapper: z is (B, latent_dim), returns (B, latent_dim).
    Does a single cast (before transpose), pads only when B % 128 != 0, and one final
    transpose+slice. Prefer recurrent_dynamics_forward_t in hot loops."""
    B, D = z.shape
    if out_dtype is None:
        out_dtype = z.dtype

    zc = z.astype(matmul_dtype)                      # cast BEFORE transpose (half traffic)
    bp = ((B + 127) // 128) * 128
    if bp != B:
        zc = jnp.pad(zc, ((0, bp - B), (0, 0)))
    z_t = zc.T                                       # (D, bp), lane-dense batch

    packed = pack_params(layer_params, matmul_dtype)
    out_t = recurrent_dynamics_forward_t(z_t, packed, num_steps=num_steps,
                                         out_dtype=out_dtype, max_tb=max_tb,
                                         num_cores=num_cores)
    return out_t[:, :B].T


# --------------------------------------------------------------------------------------
# Synthetic params + pure-JAX reference (matches the PyTorch forward)
# --------------------------------------------------------------------------------------
def init_params(key, latent_dim, num_hidden, num_layers):
    layers_dim = [latent_dim] + num_layers * [num_hidden] + [latent_dim]
    params = []
    for i, (n_in, n_out) in enumerate(zip(layers_dim[:-1], layers_dim[1:])):
        key, kw, kb = jax.random.split(key, 3)
        bound = 1.0 / jnp.sqrt(n_in)
        w = jax.random.uniform(kw, (n_out, n_in), jnp.float32, -bound, bound)
        b = jax.random.uniform(kb, (n_out,), jnp.float32, -bound, bound)
        entry = {"w": w, "b": b}
        if i < num_layers:
            entry["gamma"] = jnp.ones((n_out,), jnp.float32)
            entry["beta"] = jnp.zeros((n_out,), jnp.float32)
        params.append(entry)
    return params


def reference_forward(z, layer_params):
    num_layers = len(layer_params) - 1
    z = z.astype(jnp.float32)
    for i, p in enumerate(layer_params):
        z = z @ p["w"].T + p["b"]
        if i < num_layers:
            mean = jnp.mean(z, axis=-1, keepdims=True)
            var = jnp.mean((z - mean) ** 2, axis=-1, keepdims=True)
            z = (z - mean) * jax.lax.rsqrt(var + LN_EPS)
            z = z * p["gamma"] + p["beta"]
            z = z * jax.nn.sigmoid(z)
    return z


if __name__ == "__main__":
    latent_dim = 32
    num_hidden = 32
    num_layers = 2
    batch = 2                     # small demo shapes

    key = jax.random.PRNGKey(0)
    kz, kp = jax.random.split(key)
    z = jax.random.normal(kz, (batch, latent_dim), jnp.float32)
    params = init_params(kp, latent_dim, num_hidden, num_layers)

    ref = reference_forward(z, params)

    # bf16 MXU-operand path (default / fast).
    out_bf16 = jax.block_until_ready(
        recurrent_dynamics_forward(z, params, matmul_dtype=jnp.bfloat16))
    assert out_bf16.shape == (batch, latent_dim)
    assert jnp.allclose(out_bf16, ref, atol=5e-2, rtol=5e-2)

    # f32-operand path for a tight numerical check against the reference.
    out_f32 = jax.block_until_ready(
        recurrent_dynamics_forward(z, params, matmul_dtype=jnp.float32))
    assert out_f32.shape == (batch, latent_dim)
    assert jnp.allclose(out_f32, ref, atol=1e-4, rtol=1e-4)

    # Fused 3-step recurrent rollout (activations never leave the kernel between steps).
    steps = 3
    out_roll = jax.block_until_ready(
        recurrent_dynamics_forward(z, params, num_steps=steps, matmul_dtype=jnp.float32))
    ref_roll = z
    for _ in range(steps):
        ref_roll = reference_forward(ref_roll, params)
    assert jnp.allclose(out_roll, ref_roll, atol=1e-3, rtol=1e-3)

    print("KERNEL_OK")
</pallas_src>

<mosaic_0001>
module attributes {stable_mosaic.version = 11 : i64} {
  func.func @_mlp_kernel(%arg0: i32, %arg1: memref<32x128xbf16, #tpu.memory_space<vmem>>, %arg2: memref<3x32x32xbf16, #tpu.memory_space<vmem>>, %arg3: memref<3x32x3xf32, #tpu.memory_space<vmem>>, %arg4: memref<32x128xf32, #tpu.memory_space<vmem>>) attributes {dimension_semantics = [#tpu.dimension_semantics<parallel>], iteration_bounds = array<i64: 1>, scalar_prefetch = 0 : i64, scratch_operands = 0 : i64, tpu.core_type = #tpu.core_type<tc>, window_params = [{transform_indices = @transform_0, window_bounds = array<i64: 32, 128>}, {pipeline_mode = #tpu.pipeline_mode<synchronous>, transform_indices = @transform_1, window_bounds = array<i64: 3, 32, 32>}, {pipeline_mode = #tpu.pipeline_mode<synchronous>, transform_indices = @transform_2, window_bounds = array<i64: 3, 32, 3>}, {transform_indices = @transform_3, window_bounds = array<i64: 32, 128>}]} {
    %c0 = arith.constant 0 : index
    %c0_0 = arith.constant 0 : index
    %0 = vector.load %arg1[%c0, %c0_0] : memref<32x128xbf16, #tpu.memory_space<vmem>>, vector<32x128xbf16>
    %c0_1 = arith.constant 0 : index
    %c0_2 = arith.constant 0 : index
    %c0_3 = arith.constant 0 : index
    %1 = vector.load %arg2[%c0_1, %c0_2, %c0_3] : memref<3x32x32xbf16, #tpu.memory_space<vmem>>, vector<1x32x32xbf16>
    %2 = vector.shape_cast %1 : vector<1x32x32xbf16> to vector<32x32xbf16>
    %c0_4 = arith.constant 0 : index
    %c0_5 = arith.constant 0 : index
    %c0_6 = arith.constant 0 : index
    %3 = vector.load %arg3[%c0_4, %c0_5, %c0_6] : memref<3x32x3xf32, #tpu.memory_space<vmem>>, vector<1x32x3xf32>
    %4 = vector.shape_cast %3 : vector<1x32x3xf32> to vector<32x3xf32>
    %5 = vector.extract_strided_slice %4 {offsets = [0, 0], sizes = [32, 1], strides = [1, 1]} : vector<32x3xf32> to vector<32x1xf32>
    %cst = arith.constant dense<0.000000e+00> : vector<32x128xf32>
    %6 = tpu.matmul %2, %0, %cst {dimension_numbers = #tpu.dot_dimension_numbers<[1], [0], [0], [1], [0, 0, 1, 1], [], []>} : vector<32x32xbf16>, vector<32x128xbf16>, vector<32x128xf32> -> vector<32x128xf32>
    %7 = vector.broadcast %5 : vector<32x1xf32> to vector<32x128xf32>
    %8 = arith.addf %6, %7 : vector<32x128xf32>
    %9 = vector.extract_strided_slice %4 {offsets = [0, 1], sizes = [32, 1], strides = [1, 1]} : vector<32x3xf32> to vector<32x1xf32>
    %10 = vector.extract_strided_slice %4 {offsets = [0, 2], sizes = [32, 1], strides = [1, 1]} : vector<32x3xf32> to vector<32x1xf32>
    %cst_7 = arith.constant dense<0.000000e+00> : vector<128xf32>
    %11 = vector.multi_reduction <add>, %8, %cst_7 [0] : vector<32x128xf32> to vector<128xf32>
    %12 = vector.shape_cast %11 : vector<128xf32> to vector<1x128xf32>
    %cst_8 = arith.constant 3.200000e+01 : f32
    %13 = vector.broadcast %cst_8 : f32 to vector<1x128xf32>
    %14 = arith.divf %12, %13 : vector<1x128xf32>
    %15 = vector.broadcast %14 : vector<1x128xf32> to vector<32x128xf32>
    %16 = arith.subf %8, %15 : vector<32x128xf32>
    %17 = arith.mulf %16, %16 : vector<32x128xf32>
    %cst_9 = arith.constant dense<0.000000e+00> : vector<128xf32>
    %18 = vector.multi_reduction <add>, %17, %cst_9 [0] : vector<32x128xf32> to vector<128xf32>
    %19 = vector.shape_cast %18 : vector<128xf32> to vector<1x128xf32>
    %cst_10 = arith.constant 3.200000e+01 : f32
    %20 = vector.broadcast %cst_10 : f32 to vector<1x128xf32>
    %21 = arith.divf %19, %20 : vector<1x128xf32>
    %cst_11 = arith.constant 9.99999974E-6 : f32
    %22 = vector.broadcast %cst_11 : f32 to vector<1x128xf32>
    %23 = arith.addf %21, %22 : vector<1x128xf32>
    %24 = math.rsqrt %23 : vector<1x128xf32>
    %25 = vector.broadcast %24 : vector<1x128xf32> to vector<32x128xf32>
    %26 = arith.mulf %16, %25 : vector<32x128xf32>
    %27 = vector.broadcast %9 : vector<32x1xf32> to vector<32x128xf32>
    %28 = arith.mulf %26, %27 : vector<32x128xf32>
    %29 = vector.broadcast %10 : vector<32x1xf32> to vector<32x128xf32>
    %30 = arith.addf %28, %29 : vector<32x128xf32>
    %cst_12 = arith.constant 0.000000e+00 : f32
    %31 = vector.broadcast %cst_12 : f32 to vector<32x128xf32>
    %32 = arith.subf %31, %30 : vector<32x128xf32>
    %33 = math.exp %32 : vector<32x128xf32>
    %cst_13 = arith.constant 1.000000e+00 : f32
    %34 = vector.broadcast %cst_13 : f32 to vector<32x128xf32>
    %35 = arith.addf %34, %33 : vector<32x128xf32>
    %36 = tpu.reciprocal %35 {approx = true} : vector<32x128xf32> -> vector<32x128xf32>
    %37 = arith.mulf %30, %36 : vector<32x128xf32>
    %38 = arith.truncf %37 : vector<32x128xf32> to vector<32x128xbf16>
    %c1 = arith.constant 1 : index
    %c0_14 = arith.constant 0 : index
    %c0_15 = arith.constant 0 : index
    %39 = vector.load %arg2[%c1, %c0_14, %c0_15] : memref<3x32x32xbf16, #tpu.memory_space<vmem>>, vector<1x32x32xbf16>
    %40 = vector.shape_cast %39 : vector<1x32x32xbf16> to vector<32x32xbf16>
    %c1_16 = arith.constant 1 : index
    %c0_17 = arith.constant 0 : index
    %c0_18 = arith.constant 0 : index
    %41 = vector.load %arg3[%c1_16, %c0_17, %c0_18] : memref<3x32x3xf32, #tpu.memory_space<vmem>>, vector<1x32x3xf32>
    %42 = vector.shape_cast %41 : vector<1x32x3xf32> to vector<32x3xf32>
    %43 = vector.extract_strided_slice %42 {offsets = [0, 0], sizes = [32, 1], strides = [1, 1]} : vector<32x3xf32> to vector<32x1xf32>
    %cst_19 = arith.constant dense<0.000000e+00> : vector<32x128xf32>
    %44 = tpu.matmul %40, %38, %cst_19 {dimension_numbers = #tpu.dot_dimension_numbers<[1], [0], [0], [1], [0, 0, 1, 1], [], []>} : vector<32x32xbf16>, vector<32x128xbf16>, vector<32x128xf32> -> vector<32x128xf32>
    %45 = vector.broadcast %43 : vector<32x1xf32> to vector<32x128xf32>
    %46 = arith.addf %44, %45 : vector<32x128xf32>
    %47 = vector.extract_strided_slice %42 {offsets = [0, 1], sizes = [32, 1], strides = [1, 1]} : vector<32x3xf32> to vector<32x1xf32>
    %48 = vector.extract_strided_slice %42 {offsets = [0, 2], sizes = [32, 1], strides = [1, 1]} : vector<32x3xf32> to vector<32x1xf32>
    %cst_20 = arith.constant dense<0.000000e+00> : vector<128xf32>
    %49 = vector.multi_reduction <add>, %46, %cst_20 [0] : vector<32x128xf32> to vector<128xf32>
    %50 = vector.shape_cast %49 : vector<128xf32> to vector<1x128xf32>
    %cst_21 = arith.constant 3.200000e+01 : f32
    %51 = vector.broadcast %cst_21 : f32 to vector<1x128xf32>
    %52 = arith.divf %50, %51 : vector<1x128xf32>
    %53 = vector.broadcast %52 : vector<1x128xf32> to vector<32x128xf32>
    %54 = arith.subf %46, %53 : vector<32x128xf32>
    %55 = arith.mulf %54, %54 : vector<32x128xf32>
    %cst_22 = arith.constant dense<0.000000e+00> : vector<128xf32>
    %56 = vector.multi_reduction <add>, %55, %cst_22 [0] : vector<32x128xf32> to vector<128xf32>
    %57 = vector.shape_cast %56 : vector<128xf32> to vector<1x128xf32>
    %cst_23 = arith.constant 3.200000e+01 : f32
    %58 = vector.broadcast %cst_23 : f32 to vector<1x128xf32>
    %59 = arith.divf %57, %58 : vector<1x128xf32>
    %cst_24 = arith.constant 9.99999974E-6 : f32
    %60 = vector.broadcast %cst_24 : f32 to vector<1x128xf32>
    %61 = arith.addf %59, %60 : vector<1x128xf32>
    %62 = math.rsqrt %61 : vector<1x128xf32>
    %63 = vector.broadcast %62 : vector<1x128xf32> to vector<32x128xf32>
    %64 = arith.mulf %54, %63 : vector<32x128xf32>
    %65 = vector.broadcast %47 : vector<32x1xf32> to vector<32x128xf32>
    %66 = arith.mulf %64, %65 : vector<32x128xf32>
    %67 = vector.broadcast %48 : vector<32x1xf32> to vector<32x128xf32>
    %68 = arith.addf %66, %67 : vector<32x128xf32>
    %cst_25 = arith.constant 0.000000e+00 : f32
    %69 = vector.broadcast %cst_25 : f32 to vector<32x128xf32>
    %70 = arith.subf %69, %68 : vector<32x128xf32>
    %71 = math.exp %70 : vector<32x128xf32>
    %cst_26 = arith.constant 1.000000e+00 : f32
    %72 = vector.broadcast %cst_26 : f32 to vector<32x128xf32>
    %73 = arith.addf %72, %71 : vector<32x128xf32>
    %74 = tpu.reciprocal %73 {approx = true} : vector<32x128xf32> -> vector<32x128xf32>
    %75 = arith.mulf %68, %74 : vector<32x128xf32>
    %76 = arith.truncf %75 : vector<32x128xf32> to vector<32x128xbf16>
    %c2 = arith.constant 2 : index
    %c0_27 = arith.constant 0 : index
    %c0_28 = arith.constant 0 : index
    %77 = vector.load %arg2[%c2, %c0_27, %c0_28] : memref<3x32x32xbf16, #tpu.memory_space<vmem>>, vector<1x32x32xbf16>
    %78 = vector.shape_cast %77 : vector<1x32x32xbf16> to vector<32x32xbf16>
    %c2_29 = arith.constant 2 : index
    %c0_30 = arith.constant 0 : index
    %c0_31 = arith.constant 0 : index
    %79 = vector.load %arg3[%c2_29, %c0_30, %c0_31] : memref<3x32x3xf32, #tpu.memory_space<vmem>>, vector<1x32x3xf32>
    %80 = vector.shape_cast %79 : vector<1x32x3xf32> to vector<32x3xf32>
    %81 = vector.extract_strided_slice %80 {offsets = [0, 0], sizes = [32, 1], strides = [1, 1]} : vector<32x3xf32> to vector<32x1xf32>
    %cst_32 = arith.constant dense<0.000000e+00> : vector<32x128xf32>
    %82 = tpu.matmul %78, %76, %cst_32 {dimension_numbers = #tpu.dot_dimension_numbers<[1], [0], [0], [1], [0, 0, 1, 1], [], []>} : vector<32x32xbf16>, vector<32x128xbf16>, vector<32x128xf32> -> vector<32x128xf32>
    %83 = vector.broadcast %81 : vector<32x1xf32> to vector<32x128xf32>
    %84 = arith.addf %82, %83 : vector<32x128xf32>
    %c0_33 = arith.constant 0 : index
    %c0_34 = arith.constant 0 : index
    %85 = vector.load %arg4[%c0_33, %c0_34] : memref<32x128xf32, #tpu.memory_space<vmem>>, vector<32x128xf32>
    tpu.vector_store %arg4[%c0_33, %c0_34], %84 {strides = array<i32>} : memref<32x128xf32, #tpu.memory_space<vmem>>, vector<32x128xf32>,
    return
  }
  func.func @transform_0(%arg0: i32) -> (i32, i32) {
    %c0_i32 = arith.constant 0 : i32
    %c0_i32_0 = arith.constant 0 : i32
    return %c0_i32, %arg0 : i32, i32
  }
  func.func @transform_1(%arg0: i32) -> (i32, i32, i32) {
    %c0_i32 = arith.constant 0 : i32
    %c0_i32_0 = arith.constant 0 : i32
    %c0_i32_1 = arith.constant 0 : i32
    %c0_i32_2 = arith.constant 0 : i32
    return %c0_i32, %c0_i32_0, %c0_i32_1 : i32, i32, i32
  }
  func.func @transform_2(%arg0: i32) -> (i32, i32, i32) {
    %c0_i32 = arith.constant 0 : i32
    %c0_i32_0 = arith.constant 0 : i32
    %c0_i32_1 = arith.constant 0 : i32
    %c0_i32_2 = arith.constant 0 : i32
    return %c0_i32, %c0_i32_0, %c0_i32_1 : i32, i32, i32
  }
  func.func @transform_3(%arg0: i32) -> (i32, i32) {
    %c0_i32 = arith.constant 0 : i32
    %c0_i32_0 = arith.constant 0 : i32
    return %c0_i32, %arg0 : i32, i32
  }
}

</mosaic_0001>

<llo_original>
// kernel: tpu_custom_call.1
$region0: #{tpu_custom_call.1}
  #allocation0 [shape = 'u32[]', space=smem, size = 0x4, offset = 0x4, fixed_abs, tag = 'smem constant byte address 0x4 - core index']
  #allocation1 [shape = 'u32[144,128]{1,0:T(1,128)}', space=vmem, size = 0x12000, scoped, tag = 'internal scratch']
  %s0 = inlined_call_operand.vmem [shape: bf16[32,128], index: 0, kind: input, shape index: {}]
  %s1 = inlined_call_operand.vmem [shape: bf16[3,32,32], index: 1, kind: input, shape index: {}]
  %s2 = inlined_call_operand.vmem [shape: f32[3,32,3], index: 2, kind: input, shape index: {}]
  %s3 = inlined_call_operand.hbm [shape: f32[32,128], index: 3, kind: output, shape index: {}]
  %s4 = sld [smem:[#allocation0]]
  $region22: #{tpu_custom_call.1} parent=0
    _
  %s6 = ssub.s32 1, %s4
  %s7 = scalar_select 0, %s6, %s4
  $region1: #{tpu_custom_call.1} parent=0
    #allocation2 [shape = 'u8[16384]{0}', space=vmem, size = 0x4000, scoped, tag = 'output window, operand 0, single buffered']
    #allocation3 [shape = 's32[1]{0}', space=sflag, size = 0x4, scoped, tag = 'scoped memory for tpu_custom_call.1']
    %8 = vsyncpa [#allocation3], 0
    // Predicated region
    $region2: #{tpu_custom_call.1} parent=1 // pred_check
      _
    $region3: #{tpu_custom_call.1} parent=1 // pred_check_branch
      %10 = sbr.rel (0) target = $region5
    $region4: #{tpu_custom_call.1} parent=1 // pred_region
      _
    $region5: #{tpu_custom_call.1} parent=1 // pred_fallthru
      _
    // Predicated region
    $region6: #{tpu_custom_call.1} parent=1 // pred_check
      _
    $region7: #{tpu_custom_call.1} parent=1 // pred_check_branch
      %12 = sbr.rel (0) target = $region9
    $region8: #{tpu_custom_call.1} parent=1 // pred_region
      _
    $region9: #{tpu_custom_call.1} parent=1 // pred_fallthru
      _
    // Predicated region
    $region10: #{tpu_custom_call.1} parent=1 // pred_check
      _
    $region11: #{tpu_custom_call.1} parent=1 // pred_check_branch
      %14 = sbr.rel (0) target = $region13
    $region12: #{tpu_custom_call.1} parent=1 // pred_region
      _
    $region13: #{tpu_custom_call.1} parent=1 // pred_fallthru
      _
    %v16 = vld [vmem:[%s0] sm:$0xf]
    %v17 = vld [vmem:[%s0 + $0x4] sm:$0xf]
    %v18 = vld [vmem:[%s0 + $0x8] sm:$0xf]
    %v19 = vld [vmem:[%s0 + $0xc] sm:$0xf]
    %v20 = vld [vmem:[%s1] sm:$0xf]
    %v21 = vld [vmem:[%s1 + $0x4] sm:$0xf]
    %v22 = vld [vmem:[%s1 + $0x8] sm:$0xf]
    %v23 = vld [vmem:[%s1 + $0xc] sm:$0xf]
    %v24 = vld [vmem:[%s2] sm:$0xff]
    %v25 = vld [vmem:[%s2 + $0x8] sm:$0xff]
    %v26 = vld [vmem:[%s2 + $0x10] sm:$0xff]
    %v27 = vld [vmem:[%s2 + $0x18] sm:$0xff]
    %29 = vset.pattern.permute.xlu0 0
    %30 = vperm.xlu0 %29, %v24
    %v31 = vpop.permute.xlu0 %30
    %34 = vset.pattern.permute.xlu0 0
    %35 = vperm.xlu0 %34, %v25
    %v36 = vpop.permute.xlu0 %35
    %39 = vset.pattern.permute.xlu0 0
    %40 = vperm.xlu0 %39, %v26
    %v41 = vpop.permute.xlu0 %40
    %44 = vset.pattern.permute.xlu0 0
    %45 = vperm.xlu0 %44, %v27
    %v46 = vpop.permute.xlu0 %45
    %v52 = vunpack.c.l.b16 %v20
    %v53 = vunpack.c.l.b16 %v21
    %v54 = vunpack.c.l.b16 %v22
    %v55 = vunpack.c.l.b16 %v23
    %v56 = vpack.c.b16 %v53, %v52
    %v57 = vpack.c.b16 %v55, %v54
    %v62 = vunpack.c.l.b16 %v16
    %v63 = vunpack.c.l.b16 %v17
    %v64 = vunpack.c.l.b16 %v18
    %v65 = vunpack.c.l.b16 %v19
    %v66 = vpack.c.b16 %v63, %v62
    %v67 = vpack.c.b16 %v65, %v64
    %vm70 = vcmask 261120
    %v72 = vsel %vm70, %v56, 0
    %v75 = vsel %vm70, %v57, 0
    %77 = vmatprep.subr.bf16.mxu0 0
    %78 = vmatpush1.bf16.msra.mxu0 0
    %79 = vmatprep.subr.bf16.mxu0 0
    %80 = vmatpush1.bf16.msra.mxu0 0
    %81 = vmatprep.subr.bf16.mxu0 0
    %82 = vmatpush1.bf16.msra.mxu0 0
    %83 = vmatprep.subr.bf16.mxu0 0
    %84 = vmatpush1.bf16.msra.mxu0 0
    %85 = vmatprep.subr.bf16.mxu0 0
    %86 = vmatpush1.bf16.msra.mxu0 0
    %87 = vmatprep.subr.bf16.mxu0 0
    %88 = vmatpush1.bf16.msra.mxu0 0
    %89 = vmatprep.subr.bf16.mxu0 0
    %90 = vmatpush1.bf16.msra.mxu0 %v67
    %91 = vmatprep.subr.bf16.mxu0 0
    %92 = vmatpush1.bf16.msra.mxu0 %v66
    %93 = vmatprep.subr.bf16.mxu0 0
    %94 = vmatpush2.bf16.msra.mxu0 0
    %95 = vmatprep.subr.bf16.mxu0 0
    %96 = vmatpush2.bf16.msra.mxu0 0
    %97 = vmatprep.subr.bf16.mxu0 0
    %98 = vmatpush2.bf16.msra.mxu0 0
    %99 = vmatprep.subr.bf16.mxu0 0
    %100 = vmatpush2.bf16.msra.mxu0 0
    %101 = vmatprep.subr.bf16.mxu0 0
    %102 = vmatpush2.bf16.msra.mxu0 0
    %103 = vmatprep.subr.bf16.mxu0 0
    %104 = vmatpush2.bf16.msra.mxu0 0
    %105 = vmatprep.subr.bf16.mxu0 0
    %106 = vmatpush2.bf16.msra.mxu0 0
    %107 = vmatprep.subr.bf16.mxu0 0
    %108 = vmatpush2.bf16.msra.mxu0 0
    %109 = vmatprep.mubr.bf16.mxu0 0
    %110 = vmatmul.mubr.bf16.gmra.mxu0 %v72
    %v111 = vpop.f32.mrf.mxu0
    %v112 = vadd.f32 %v31, %v111
    %v113 = vpop.f32.mrf.mxu0
    %v114 = vpop.f32.mrf.mxu0
    %v115 = vadd.f32 %v36, %v114
    %v116 = vpop.f32.mrf.mxu0
    %117 = vmatprep.mubr.bf16.mxu0 0
    %118 = vmatmul.mubr.bf16.gmra.mxu0 %v75
    %v119 = vpop.f32.mrf.mxu0
    %v120 = vadd.f32 %v41, %v119
    %v121 = vpop.f32.mrf.mxu0
    %v122 = vpop.f32.mrf.mxu0
    %v123 = vadd.f32 %v46, %v122
    %v124 = vpop.f32.mrf.mxu0
    %125 = vdwg.mxu0
    %v126 = vadd.f32 %v112, %v115
    %v127 = vadd.f32 %v126, %v120
    %v128 = vadd.f32 %v127, %v123
    %v129 = vrot.slane %v128, 4
    %v130 = vadd.f32 %v128, %v129
    %v131 = vrot.slane %v130, 2
    %v132 = vadd.f32 %v130, %v131
    %v133 = vrot.slane %v132, 1
    %v134 = vadd.f32 %v132, %v133
    %v135 = vrcp.pop 32.0
    %v136 = vmul.f32 %v134, %v135
    %v137 = vsub.f32 %v112, %v136
    %v138 = vsub.f32 %v115, %v136
    %v139 = vsub.f32 %v120, %v136
    %v140 = vsub.f32 %v123, %v136
    %v141 = vmul.f32 %v137, %v137
    %v142 = vmul.f32 %v138, %v138
    %v143 = vmul.f32 %v139, %v139
    %v144 = vmul.f32 %v140, %v140
    %v145 = vadd.f32 %v141, %v142
    %v146 = vadd.f32 %v145, %v143
    %v147 = vadd.f32 %v146, %v144
    %v148 = vrot.slane %v147, 4
    %v149 = vadd.f32 %v147, %v148
    %v150 = vrot.slane %v149, 2
    %v151 = vadd.f32 %v149, %v150
    %v152 = vrot.slane %v151, 1
    %v153 = vadd.f32 %v151, %v152
    %v154 = vmul.f32 %v153, %v135
    %v155 = vadd.f32 %v154, 1e-05
    %v156 = vrsqrt.pop %v155
    %v157 = vmul.f32 %v137, %v156
    %v158 = vmul.f32 %v138, %v156
    %v159 = vmul.f32 %v139, %v156
    %v160 = vmul.f32 %v140, %v156
    %161 = vset.pattern.permute.xlu0 1
    %162 = vperm.xlu0 %161, %v24
    %v163 = vpop.permute.xlu0 %162
    %165 = vset.pattern.permute.xlu0 1
    %166 = vperm.xlu0 %165, %v25
    %v167 = vpop.permute.xlu0 %166
    %169 = vset.pattern.permute.xlu0 1
    %170 = vperm.xlu0 %169, %v26
    %v171 = vpop.permute.xlu0 %170
    %173 = vset.pattern.permute.xlu0 1
    %174 = vperm.xlu0 %173, %v27
    %v175 = vpop.permute.xlu0 %174
    %v177 = vmul.f32 %v157, %v163
    %v178 = vmul.f32 %v158, %v167
    %v179 = vmul.f32 %v159, %v171
    %v180 = vmul.f32 %v160, %v175
    %181 = vset.pattern.permute.xlu0 2
    %182 = vperm.xlu0 %181, %v24
    %v183 = vpop.permute.xlu0 %182
    %185 = vset.pattern.permute.xlu0 2
    %186 = vperm.xlu0 %185, %v25
    %v187 = vpop.permute.xlu0 %186
    %189 = vset.pattern.permute.xlu0 2
    %190 = vperm.xlu0 %189, %v26
    %v191 = vpop.permute.xlu0 %190
    %193 = vset.pattern.permute.xlu0 2
    %194 = vperm.xlu0 %193, %v27
    %v195 = vpop.permute.xlu0 %194
    %v197 = vadd.f32 %v177, %v183
    %v198 = vadd.f32 %v178, %v187
    %v199 = vadd.f32 %v179, %v191
    %v200 = vadd.f32 %v180, %v195
    %v201 = vsub.f32 0.0, %v197
    %v202 = vsub.f32 0.0, %v198
    %v203 = vsub.f32 0.0, %v199
    %v204 = vsub.f32 0.0, %v200
    %v205 = vmul.f32 %v201, 1.442695
    %v206 = vpow.pop %v205
    %v207 = vmul.f32 %v202, 1.442695
    %v208 = vpow.pop %v207
    %v209 = vmul.f32 %v203, 1.442695
    %v210 = vpow.pop %v209
    %v211 = vmul.f32 %v204, 1.442695
    %v212 = vpow.pop %v211
    %v213 = vadd.f32 %v206, 1.0
    %v214 = vadd.f32 %v208, 1.0
    %v215 = vadd.f32 %v210, 1.0
    %v216 = vadd.f32 %v212, 1.0
    %v217 = vrcp.pop %v213
    %v218 = vrcp.pop %v214
    %v219 = vrcp.pop %v215
    %v220 = vrcp.pop %v216
    %v221 = vmul.f32 %v197, %v217
    %v222 = vmul.f32 %v198, %v218
    %v223 = vmul.f32 %v199, %v219
    %v224 = vmul.f32 %v200, %v220
    %v225 = vpack.c.bf16 %v222, %v221
    %v226 = vpack.c.bf16 %v224, %v223
    %s227 = scalar_lea.vmem %s1, 16
    %v228 = vld [vmem:[%s227] sm:$0xf]
    %v229 = vld [vmem:[%s227 + $0x4] sm:$0xf]
    %v230 = vld [vmem:[%s227 + $0x8] sm:$0xf]
    %v231 = vld [vmem:[%s227 + $0xc] sm:$0xf]
    %s232 = scalar_lea.vmem %s2, 32
    %v233 = vld [vmem:[%s232] sm:$0xff]
    %v234 = vld [vmem:[%s232 + $0x8] sm:$0xff]
    %v235 = vld [vmem:[%s232 + $0x10] sm:$0xff]
    %v236 = vld [vmem:[%s232 + $0x18] sm:$0xff]
    %238 = vset.pattern.permute.xlu0 0
    %239 = vperm.xlu0 %238, %v233
    %v240 = vpop.permute.xlu0 %239
    %243 = vset.pattern.permute.xlu0 0
    %244 = vperm.xlu0 %243, %v234
    %v245 = vpop.permute.xlu0 %244
    %248 = vset.pattern.permute.xlu0 0
    %249 = vperm.xlu0 %248, %v235
    %v250 = vpop.permute.xlu0 %249
    %253 = vset.pattern.permute.xlu0 0
    %254 = vperm.xlu0 %253, %v236
    %v255 = vpop.permute.xlu0 %254
    %v261 = vunpack.c.l.b16 %v228
    %v262 = vunpack.c.l.b16 %v229
    %v263 = vunpack.c.l.b16 %v230
    %v264 = vunpack.c.l.b16 %v231
    %v265 = vpack.c.b16 %v262, %v261
    %v266 = vpack.c.b16 %v264, %v263
    %v268 = vsel %vm70, %v265, 0
    %v271 = vsel %vm70, %v266, 0
    %273 = vmatprep.subr.bf16.mxu0 0
    %274 = vmatpush1.bf16.msra.mxu0 0
    %275 = vmatprep.subr.bf16.mxu0 0
    %276 = vmatpush1.bf16.msra.mxu0 0
    %277 = vmatprep.subr.bf16.mxu0 0
    %278 = vmatpush1.bf16.msra.mxu0 0
    %279 = vmatprep.subr.bf16.mxu0 0
    %280 = vmatpush1.bf16.msra.mxu0 0
    %281 = vmatprep.subr.bf16.mxu0 0
    %282 = vmatpush1.bf16.msra.mxu0 0
    %283 = vmatprep.subr.bf16.mxu0 0
    %284 = vmatpush1.bf16.msra.mxu0 0
    %285 = vmatprep.subr.bf16.mxu0 0
    %286 = vmatpush1.bf16.msra.mxu0 %v226
    %287 = vmatprep.subr.bf16.mxu0 0
    %288 = vmatpush1.bf16.msra.mxu0 %v225
    %289 = vmatprep.subr.bf16.mxu0 0
    %290 = vmatpush2.bf16.msra.mxu0 0
    %291 = vmatprep.subr.bf16.mxu0 0
    %292 = vmatpush2.bf16.msra.mxu0 0
    %293 = vmatprep.subr.bf16.mxu0 0
    %294 = vmatpush2.bf16.msra.mxu0 0
    %295 = vmatprep.subr.bf16.mxu0 0
    %296 = vmatpush2.bf16.msra.mxu0 0
    %297 = vmatprep.subr.bf16.mxu0 0
    %298 = vmatpush2.bf16.msra.mxu0 0
    %299 = vmatprep.subr.bf16.mxu0 0
    %300 = vmatpush2.bf16.msra.mxu0 0
    %301 = vmatprep.subr.bf16.mxu0 0
    %302 = vmatpush2.bf16.msra.mxu0 0
    %303 = vmatprep.subr.bf16.mxu0 0
    %304 = vmatpush2.bf16.msra.mxu0 0
    %305 = vmatprep.mubr.bf16.mxu0 0
    %306 = vmatmul.mubr.bf16.gmra.mxu0 %v268
    %v307 = vpop.f32.mrf.mxu0
    %v308 = vadd.f32 %v240, %v307
    %v309 = vpop.f32.mrf.mxu0
    %v310 = vpop.f32.mrf.mxu0
    %v311 = vadd.f32 %v245, %v310
    %v312 = vpop.f32.mrf.mxu0
    %313 = vmatprep.mubr.bf16.mxu0 0
    %314 = vmatmul.mubr.bf16.gmra.mxu0 %v271
    %v315 = vpop.f32.mrf.mxu0
    %v316 = vadd.f32 %v250, %v315
    %v317 = vpop.f32.mrf.mxu0
    %v318 = vpop.f32.mrf.mxu0
    %v319 = vadd.f32 %v255, %v318
    %v320 = vpop.f32.mrf.mxu0
    %321 = vdwg.mxu0
    %v322 = vadd.f32 %v308, %v311
    %v323 = vadd.f32 %v322, %v316
    %v324 = vadd.f32 %v323, %v319
    %v325 = vrot.slane %v324, 4
    %v326 = vadd.f32 %v324, %v325
    %v327 = vrot.slane %v326, 2
    %v328 = vadd.f32 %v326, %v327
    %v329 = vrot.slane %v328, 1
    %v330 = vadd.f32 %v328, %v329
    %v331 = vmul.f32 %v330, %v135
    %v332 = vsub.f32 %v308, %v331
    %v333 = vsub.f32 %v311, %v331
    %v334 = vsub.f32 %v316, %v331
    %v335 = vsub.f32 %v319, %v331
    %v336 = vmul.f32 %v332, %v332
    %v337 = vmul.f32 %v333, %v333
    %v338 = vmul.f32 %v334, %v334
    %v339 = vmul.f32 %v335, %v335
    %v340 = vadd.f32 %v336, %v337
    %v341 = vadd.f32 %v340, %v338
    %v342 = vadd.f32 %v341, %v339
    %v343 = vrot.slane %v342, 4
    %v344 = vadd.f32 %v342, %v343
    %v345 = vrot.slane %v344, 2
    %v346 = vadd.f32 %v344, %v345
    %v347 = vrot.slane %v346, 1
    %v348 = vadd.f32 %v346, %v347
    %v349 = vmul.f32 %v348, %v135
    %v350 = vadd.f32 %v349, 1e-05
    %v351 = vrsqrt.pop %v350
    %v352 = vmul.f32 %v332, %v351
    %v353 = vmul.f32 %v333, %v351
    %v354 = vmul.f32 %v334, %v351
    %v355 = vmul.f32 %v335, %v351
    %356 = vset.pattern.permute.xlu0 1
    %357 = vperm.xlu0 %356, %v233
    %v358 = vpop.permute.xlu0 %357
    %360 = vset.pattern.permute.xlu0 1
    %361 = vperm.xlu0 %360, %v234
    %v362 = vpop.permute.xlu0 %361
    %364 = vset.pattern.permute.xlu0 1
    %365 = vperm.xlu0 %364, %v235
    %v366 = vpop.permute.xlu0 %365
    %368 = vset.pattern.permute.xlu0 1
    %369 = vperm.xlu0 %368, %v236
    %v370 = vpop.permute.xlu0 %369
    %v372 = vmul.f32 %v352, %v358
    %v373 = vmul.f32 %v353, %v362
    %v374 = vmul.f32 %v354, %v366
    %v375 = vmul.f32 %v355, %v370
    %376 = vset.pattern.permute.xlu0 2
    %377 = vperm.xlu0 %376, %v233
    %v378 = vpop.permute.xlu0 %377
    %380 = vset.pattern.permute.xlu0 2
    %381 = vperm.xlu0 %380, %v234
    %v382 = vpop.permute.xlu0 %381
    %384 = vset.pattern.permute.xlu0 2
    %385 = vperm.xlu0 %384, %v235
    %v386 = vpop.permute.xlu0 %385
    %388 = vset.pattern.permute.xlu0 2
    %389 = vperm.xlu0 %388, %v236
    %v390 = vpop.permute.xlu0 %389
    %v392 = vadd.f32 %v372, %v378
    %v393 = vadd.f32 %v373, %v382
    %v394 = vadd.f32 %v374, %v386
    %v395 = vadd.f32 %v375, %v390
    %v396 = vsub.f32 0.0, %v392
    %v397 = vsub.f32 0.0, %v393
    %v398 = vsub.f32 0.0, %v394
    %v399 = vsub.f32 0.0, %v395
    %v400 = vmul.f32 %v396, 1.442695
    %v401 = vpow.pop %v400
    %v402 = vmul.f32 %v397, 1.442695
    %v403 = vpow.pop %v402
    %v404 = vmul.f32 %v398, 1.442695
    %v405 = vpow.pop %v404
    %v406 = vmul.f32 %v399, 1.442695
    %v407 = vpow.pop %v406
    %v408 = vadd.f32 %v401, 1.0
    %v409 = vadd.f32 %v403, 1.0
    %v410 = vadd.f32 %v405, 1.0
    %v411 = vadd.f32 %v407, 1.0
    %v412 = vrcp.pop %v408
    %v413 = vrcp.pop %v409
    %v414 = vrcp.pop %v410
    %v415 = vrcp.pop %v411
    %v416 = vmul.f32 %v392, %v412
    %v417 = vmul.f32 %v393, %v413
    %v418 = vmul.f32 %v394, %v414
    %v419 = vmul.f32 %v395, %v415
    %v420 = vpack.c.bf16 %v417, %v416
    %v421 = vpack.c.bf16 %v419, %v418
    %s422 = scalar_lea.vmem %s1, 32
    %v423 = vld [vmem:[%s422] sm:$0xf]
    %v424 = vld [vmem:[%s422 + $0x4] sm:$0xf]
    %v425 = vld [vmem:[%s422 + $0x8] sm:$0xf]
    %v426 = vld [vmem:[%s422 + $0xc] sm:$0xf]
    %s427 = scalar_lea.vmem %s2, 64
    %v428 = vld [vmem:[%s427] sm:$0xff]
    %v429 = vld [vmem:[%s427 + $0x8] sm:$0xff]
    %v430 = vld [vmem:[%s427 + $0x10] sm:$0xff]
    %v431 = vld [vmem:[%s427 + $0x18] sm:$0xff]
    %433 = vset.pattern.permute.xlu0 0
    %434 = vperm.xlu0 %433, %v428
    %v435 = vpop.permute.xlu0 %434
    %438 = vset.pattern.permute.xlu0 0
    %439 = vperm.xlu0 %438, %v429
    %v440 = vpop.permute.xlu0 %439
    %443 = vset.pattern.permute.xlu0 0
    %444 = vperm.xlu0 %443, %v430
    %v445 = vpop.permute.xlu0 %444
    %448 = vset.pattern.permute.xlu0 0
    %449 = vperm.xlu0 %448, %v431
    %v450 = vpop.permute.xlu0 %449
    %v456 = vunpack.c.l.b16 %v423
    %v457 = vunpack.c.l.b16 %v424
    %v458 = vunpack.c.l.b16 %v425
    %v459 = vunpack.c.l.b16 %v426
    %v460 = vpack.c.b16 %v457, %v456
    %v461 = vpack.c.b16 %v459, %v458
    %v463 = vsel %vm70, %v460, 0
    %v466 = vsel %vm70, %v461, 0
    %468 = vmatprep.subr.bf16.mxu0 0
    %469 = vmatpush1.bf16.msra.mxu0 0
    %470 = vmatprep.subr.bf16.mxu0 0
    %471 = vmatpush1.bf16.msra.mxu0 0
    %472 = vmatprep.subr.bf16.mxu0 0
    %473 = vmatpush1.bf16.msra.mxu0 0
    %474 = vmatprep.subr.bf16.mxu0 0
    %475 = vmatpush1.bf16.msra.mxu0 0
    %476 = vmatprep.subr.bf16.mxu0 0
    %477 = vmatpush1.bf16.msra.mxu0 0
    %478 = vmatprep.subr.bf16.mxu0 0
    %479 = vmatpush1.bf16.msra.mxu0 0
    %480 = vmatprep.subr.bf16.mxu0 0
    %481 = vmatpush1.bf16.msra.mxu0 %v421
    %482 = vmatprep.subr.bf16.mxu0 0
    %483 = vmatpush1.bf16.msra.mxu0 %v420
    %484 = vmatprep.subr.bf16.mxu0 0
    %485 = vmatpush2.bf16.msra.mxu0 0
    %486 = vmatprep.subr.bf16.mxu0 0
    %487 = vmatpush2.bf16.msra.mxu0 0
    %488 = vmatprep.subr.bf16.mxu0 0
    %489 = vmatpush2.bf16.msra.mxu0 0
    %490 = vmatprep.subr.bf16.mxu0 0
    %491 = vmatpush2.bf16.msra.mxu0 0
    %492 = vmatprep.subr.bf16.mxu0 0
    %493 = vmatpush2.bf16.msra.mxu0 0
    %494 = vmatprep.subr.bf16.mxu0 0
    %495 = vmatpush2.bf16.msra.mxu0 0
    %496 = vmatprep.subr.bf16.mxu0 0
    %497 = vmatpush2.bf16.msra.mxu0 0
    %498 = vmatprep.subr.bf16.mxu0 0
    %499 = vmatpush2.bf16.msra.mxu0 0
    %500 = vmatprep.mubr.bf16.mxu0 0
    %501 = vmatmul.mubr.bf16.gmra.mxu0 %v463
    %v502 = vpop.f32.mrf.mxu0
    %v503 = vadd.f32 %v435, %v502
    %v504 = vpop.f32.mrf.mxu0
    %v505 = vpop.f32.mrf.mxu0
    %v506 = vadd.f32 %v440, %v505
    %v507 = vpop.f32.mrf.mxu0
    %508 = vmatprep.mubr.bf16.mxu0 0
    %509 = vmatmul.mubr.bf16.gmra.mxu0 %v466
    %v510 = vpop.f32.mrf.mxu0
    %v511 = vadd.f32 %v445, %v510
    %v512 = vpop.f32.mrf.mxu0
    %v513 = vpop.f32.mrf.mxu0
    %v514 = vadd.f32 %v450, %v513
    %v515 = vpop.f32.mrf.mxu0
    %516 = vdwg.mxu0
    %517 = vst [vmem:[#allocation2] sm:$0xff] %v503
    %518 = vst [vmem:[#allocation2 + $0x8] sm:$0xff] %v506
    %519 = vst [vmem:[#allocation2 + $0x10] sm:$0xff] %v511
    %520 = vst [vmem:[#allocation2 + $0x18] sm:$0xff] %v514
    // Predicated region
    $region14: #{tpu_custom_call.1} parent=1 // pred_check
      _
    $region15: #{tpu_custom_call.1} parent=1 // pred_check_branch
      %522 = sbr.rel (0) target = $region17
    $region16: #{tpu_custom_call.1} parent=1 // pred_region
      %s524 = ssub.s32 512, 512
      %525 = vsyncadd [#allocation3], %s524
      %s526 = sshll.u32 [#allocation2], 4
      %s527 = int_to_ptr.vmem [resolvable:$true] %s526
      %532 = dma.vmem_to_hbm [thread:$0]  %s527, 512, %s3, [#allocation3], 128, 128, 8
    $region17: #{tpu_custom_call.1} parent=1 // pred_fallthru
      _
    // Predicated region
    $region18: #{tpu_custom_call.1} parent=1 // pred_check
      _
    $region19: #{tpu_custom_call.1} parent=1 // pred_check_branch
      %534 = sbr.rel (0) target = $region21
    $region20: #{tpu_custom_call.1} parent=1 // pred_region
      %535 = dma.done [#allocation3], 512
    $region21: #{tpu_custom_call.1} parent=1 // pred_fallthru
      _
    %536 = vsyncpa [#allocation3], 1

</llo_original>
